<compile_context>
chip_gen: v6e
topology: v6e:2x2x1
jax: 0.10.0
libtpu: 0.0.40
codegen_flags: <defaults>
</compile_context>

<pallas_src>
import jax
import jax.numpy as jnp
from jax.experimental import pallas as pl
from jax.experimental.pallas import tpu as pltpu

# Module hyper-parameters (mirrors train_mlp.py)
HIDDEN_LAYERS = 2
HIDDEN_SIZE = 8

LANE = 128  # lane width; hidden/output dims are zero-padded to this for dense stores


def _round_up(n, m):
    return ((n + m - 1) // m) * m


def _slab_layout(in_dim, width=LANE):
    """Row offsets of each weight/bias inside the packed (total, width) slab.
    Every segment starts on a sublane (8-row) boundary."""
    L = {}
    off = 0
    L["w_in"] = off;  off = _round_up(in_dim, 8)
    L["b_in"] = off;  off += 8
    L["w_h0"] = off;  off += width
    L["b_h0"] = off;  off += 8
    L["w_h1"] = off;  off += width
    L["b_h1"] = off;  off += 8
    L["w_out"] = off; off += width
    L["b_out"] = off; off += 8
    L["total"] = off
    return L


def pack_params(params, width=LANE):
    """Pack all weights/biases into one zero-padded f32 slab.

    Hidden/output dims are padded to `width` columns and the hidden/output weights are
    padded to `width` input rows.  Because the padded bias/weight entries are zero and
    ReLU(0) == 0, the padded activation columns stay exactly zero, so results in the
    first `hidden`/`out_dim` columns are bit-for-bit what the unpadded network computes.
    """
    in_dim, hidden = params["w_in"].shape
    out_dim = params["w_out"].shape[1]
    L = _slab_layout(in_dim, width)

    slab = jnp.zeros((L["total"], width), jnp.float32)
    slab = slab.at[L["w_in"]:L["w_in"] + in_dim, :hidden].set(params["w_in"])
    slab = slab.at[L["b_in"], :hidden].set(params["b_in"].reshape(-1))
    slab = slab.at[L["w_h0"]:L["w_h0"] + hidden, :hidden].set(params["w_h0"])
    slab = slab.at[L["b_h0"], :hidden].set(params["b_h0"].reshape(-1))
    slab = slab.at[L["w_h1"]:L["w_h1"] + hidden, :hidden].set(params["w_h1"])
    slab = slab.at[L["b_h1"], :hidden].set(params["b_h1"].reshape(-1))
    slab = slab.at[L["w_out"]:L["w_out"] + hidden, :out_dim].set(params["w_out"])
    slab = slab.at[L["b_out"], :out_dim].set(params["b_out"].reshape(-1))
    return slab


def _make_kernel(in_dim, width=LANE):
    L = _slab_layout(in_dim, width)

    def kernel(x_ref, slab_ref, o_ref):
        # Upcast the bf16-streamed activations once; all VPU math stays f32 (v5e-safe).
        h = x_ref[...].astype(jnp.float32)

        # input layer + ReLU   (bt, in_dim) @ (in_dim, 128)
        h = jnp.dot(h, slab_ref[L["w_in"]:L["w_in"] + in_dim, :],
                    preferred_element_type=jnp.float32)
        h = jnp.maximum(h + slab_ref[L["b_in"]:L["b_in"] + 1, :], 0.0)

        # hidden layer 0 + ReLU   (bt, 128) @ (128, 128)
        h = jnp.dot(h, slab_ref[L["w_h0"]:L["w_h0"] + width, :],
                    preferred_element_type=jnp.float32)
        h = jnp.maximum(h + slab_ref[L["b_h0"]:L["b_h0"] + 1, :], 0.0)

        # hidden layer 1 + ReLU
        h = jnp.dot(h, slab_ref[L["w_h1"]:L["w_h1"] + width, :],
                    preferred_element_type=jnp.float32)
        h = jnp.maximum(h + slab_ref[L["b_h1"]:L["b_h1"] + 1, :], 0.0)

        # output layer (no activation); lane-dense (bt, 128) store.
        h = jnp.dot(h, slab_ref[L["w_out"]:L["w_out"] + width, :],
                    preferred_element_type=jnp.float32)
        o_ref[...] = (h + slab_ref[L["b_out"]:L["b_out"] + 1, :]).astype(o_ref.dtype)

    return kernel, L


def mlp_forward(x, params, *, batch_tile=1024, stream_dtype=jnp.bfloat16):
    """x: (B, input_dim). params: dict of weights/biases (see init_params).

    batch_tile: rows per grid step (clamped to the batch and rounded to a multiple of 8).
    Per-step VMEM footprint (~2*bt*in_dim*2B x-buffers + 2*bt*128*4B out-buffers +
    2*216 KiB weight slab) stays far under the scoped VMEM limit on every chip even at
    bt=1024, while per-step overhead (~0.35 us) is well amortized.
    """
    B, in_dim = x.shape
    out_dim = params["w_out"].shape[1]
    assert in_dim == params["w_in"].shape[0]

    bt = _round_up(min(batch_tile, _round_up(B, 8)), 8)
    B_pad = _round_up(B, bt)

    # Stream activations from HBM as bf16; pad batch to a whole number of tiles.
    x_stream = x.astype(stream_dtype)
    if B_pad != B:
        x_stream = jnp.pad(x_stream, ((0, B_pad - B), (0, 0)))

    slab = pack_params(params)
    kernel, L = _make_kernel(in_dim)
    total_rows = L["total"]

    grid = (B_pad // bt,)
    flops = 2 * B_pad * (in_dim * LANE + 3 * LANE * LANE)
    bytes_accessed = (x_stream.size * x_stream.dtype.itemsize
                      + B_pad * LANE * 4
                      + slab.size * 4)

    out = pl.pallas_call(
        kernel,
        out_shape=jax.ShapeDtypeStruct((B_pad, LANE), jnp.float32),
        grid=grid,
        in_specs=[
            # x: tiled along batch, full (tiny) feature dim.
            pl.BlockSpec((bt, in_dim), lambda i: (i, 0)),
            # packed weight slab: constant block index -> fetched once, reused every step.
            pl.BlockSpec((total_rows, LANE), lambda i: (0, 0)),
        ],
        out_specs=pl.BlockSpec((bt, LANE), lambda i: (i, 0)),
        compiler_params=pltpu.CompilerParams(
            dimension_semantics=("parallel",)),
        cost_estimate=pl.CostEstimate(flops=flops, transcendentals=0,
                                      bytes_accessed=bytes_accessed),
    )(x_stream, slab)

    return out[:B, :out_dim]


def init_params(key, input_dim, output_dim, hidden_dim=HIDDEN_SIZE):
    """Deterministic init mimicking nn.Linear's default U(-1/sqrt(fan_in), +1/sqrt(fan_in)).
    Weights are stored transposed relative to PyTorch: (in_features, out_features)."""
    def linear(k, fan_in, fan_out):
        kw, kb = jax.random.split(k)
        bound = 1.0 / jnp.sqrt(fan_in)
        w = jax.random.uniform(kw, (fan_in, fan_out), jnp.float32, -bound, bound)
        b = jax.random.uniform(kb, (1, fan_out), jnp.float32, -bound, bound)
        return w, b

    k0, k1, k2, k3 = jax.random.split(key, 4)
    w_in, b_in = linear(k0, input_dim, HIDDEN_SIZE if hidden_dim is None else hidden_dim)
    w_h0, b_h0 = linear(k1, hidden_dim, hidden_dim)
    w_h1, b_h1 = linear(k2, hidden_dim, hidden_dim)
    w_out, b_out = linear(k3, hidden_dim, output_dim)
    return dict(w_in=w_in, b_in=b_in, w_h0=w_h0, b_h0=b_h0,
                w_h1=w_h1, b_h1=b_h1, w_out=w_out, b_out=b_out)


def mlp_reference(x, p):
    h = jnp.maximum(x @ p["w_in"] + p["b_in"], 0.0)
    h = jnp.maximum(h @ p["w_h0"] + p["b_h0"], 0.0)
    h = jnp.maximum(h @ p["w_h1"] + p["b_h1"], 0.0)
    return h @ p["w_out"] + p["b_out"]


if __name__ == "__main__":
    key = jax.random.PRNGKey(0)
    k_x, k_p, k_x2 = jax.random.split(key, 3)

    batch, input_dim, output_dim = 8, 16, 4
    x = jax.random.normal(k_x, (batch, input_dim), jnp.float32)
    params = init_params(k_p, input_dim, output_dim)

    # jit so param packing + pallas_call + output slice compile into one program.
    fwd = jax.jit(mlp_forward, static_argnames=("batch_tile", "stream_dtype"))

    out = jax.block_until_ready(fwd(x, params))
    # Reference uses the same bf16-quantized activations the kernel streams from HBM.
    x_q = x.astype(jnp.bfloat16).astype(jnp.float32)
    ref = mlp_reference(x_q, params)
    assert out.shape == (batch, output_dim)
    assert jnp.allclose(out, ref, atol=1e-4, rtol=1e-4)

    # Exercise the multi-step tiled path (grid > 1) with a non-divisible batch.
    batch2 = 1000
    x2 = jax.random.normal(k_x2, (batch2, input_dim), jnp.float32)
    out2 = jax.block_until_ready(fwd(x2, params, batch_tile=256))
    ref2 = mlp_reference(x2.astype(jnp.bfloat16).astype(jnp.float32), params)
    assert out2.shape == (batch2, output_dim)
    assert jnp.allclose(out2, ref2, atol=1e-4, rtol=1e-4)

    print("KERNEL_OK")
</pallas_src>

<mosaic_0001>
module attributes {stable_mosaic.version = 11 : i64} {
  func.func @kernel(%arg0: i32, %arg1: memref<8x16xbf16, #tpu.memory_space<vmem>>, %arg2: memref<432x128xf32, #tpu.memory_space<vmem>>, %arg3: memref<8x128xf32, #tpu.memory_space<vmem>>) attributes {dimension_semantics = [#tpu.dimension_semantics<parallel>], iteration_bounds = array<i64: 1>, scalar_prefetch = 0 : i64, scratch_operands = 0 : i64, tpu.core_type = #tpu.core_type<tc>, window_params = [{transform_indices = @transform_0, window_bounds = array<i64: 8, 16>}, {pipeline_mode = #tpu.pipeline_mode<synchronous>, transform_indices = @transform_1, window_bounds = array<i64: 432, 128>}, {transform_indices = @transform_2, window_bounds = array<i64: 8, 128>}]} {
    %c0 = arith.constant 0 : index
    %c0_0 = arith.constant 0 : index
    %0 = vector.load %arg1[%c0, %c0_0] : memref<8x16xbf16, #tpu.memory_space<vmem>>, vector<8x16xbf16>
    %1 = arith.extf %0 : vector<8x16xbf16> to vector<8x16xf32>
    %c0_1 = arith.constant 0 : index
    %c0_2 = arith.constant 0 : index
    %2 = vector.load %arg2[%c0_1, %c0_2] : memref<432x128xf32, #tpu.memory_space<vmem>>, vector<16x128xf32>
    %cst = arith.constant dense<0.000000e+00> : vector<8x128xf32>
    %3 = tpu.matmul %1, %2, %cst {dimension_numbers = #tpu.dot_dimension_numbers<[1], [0], [0], [1], [0, 0, 1, 1], [], []>} : vector<8x16xf32>, vector<16x128xf32>, vector<8x128xf32> -> vector<8x128xf32>
    %c16 = arith.constant 16 : index
    %c0_3 = arith.constant 0 : index
    %4 = vector.load %arg2[%c16, %c0_3] : memref<432x128xf32, #tpu.memory_space<vmem>>, vector<1x128xf32>
    %5 = vector.broadcast %4 : vector<1x128xf32> to vector<8x128xf32>
    %6 = arith.addf %3, %5 : vector<8x128xf32>
    %cst_4 = arith.constant 0.000000e+00 : f32
    %7 = vector.broadcast %cst_4 : f32 to vector<8x128xf32>
    %8 = arith.maximumf %6, %7 : vector<8x128xf32>
    %c24 = arith.constant 24 : index
    %c0_5 = arith.constant 0 : index
    %9 = vector.load %arg2[%c24, %c0_5] : memref<432x128xf32, #tpu.memory_space<vmem>>, vector<128x128xf32>
    %cst_6 = arith.constant dense<0.000000e+00> : vector<8x128xf32>
    %10 = tpu.matmul %8, %9, %cst_6 {dimension_numbers = #tpu.dot_dimension_numbers<[1], [0], [0], [1], [0, 0, 1, 1], [], []>} : vector<8x128xf32>, vector<128x128xf32>, vector<8x128xf32> -> vector<8x128xf32>
    %c152 = arith.constant 152 : index
    %c0_7 = arith.constant 0 : index
    %11 = vector.load %arg2[%c152, %c0_7] : memref<432x128xf32, #tpu.memory_space<vmem>>, vector<1x128xf32>
    %12 = vector.broadcast %11 : vector<1x128xf32> to vector<8x128xf32>
    %13 = arith.addf %10, %12 : vector<8x128xf32>
    %cst_8 = arith.constant 0.000000e+00 : f32
    %14 = vector.broadcast %cst_8 : f32 to vector<8x128xf32>
    %15 = arith.maximumf %13, %14 : vector<8x128xf32>
    %c160 = arith.constant 160 : index
    %c0_9 = arith.constant 0 : index
    %16 = vector.load %arg2[%c160, %c0_9] : memref<432x128xf32, #tpu.memory_space<vmem>>, vector<128x128xf32>
    %cst_10 = arith.constant dense<0.000000e+00> : vector<8x128xf32>
    %17 = tpu.matmul %15, %16, %cst_10 {dimension_numbers = #tpu.dot_dimension_numbers<[1], [0], [0], [1], [0, 0, 1, 1], [], []>} : vector<8x128xf32>, vector<128x128xf32>, vector<8x128xf32> -> vector<8x128xf32>
    %c288 = arith.constant 288 : index
    %c0_11 = arith.constant 0 : index
    %18 = vector.load %arg2[%c288, %c0_11] : memref<432x128xf32, #tpu.memory_space<vmem>>, vector<1x128xf32>
    %19 = vector.broadcast %18 : vector<1x128xf32> to vector<8x128xf32>
    %20 = arith.addf %17, %19 : vector<8x128xf32>
    %cst_12 = arith.constant 0.000000e+00 : f32
    %21 = vector.broadcast %cst_12 : f32 to vector<8x128xf32>
    %22 = arith.maximumf %20, %21 : vector<8x128xf32>
    %c296 = arith.constant 296 : index
    %c0_13 = arith.constant 0 : index
    %23 = vector.load %arg2[%c296, %c0_13] : memref<432x128xf32, #tpu.memory_space<vmem>>, vector<128x128xf32>
    %cst_14 = arith.constant dense<0.000000e+00> : vector<8x128xf32>
    %24 = tpu.matmul %22, %23, %cst_14 {dimension_numbers = #tpu.dot_dimension_numbers<[1], [0], [0], [1], [0, 0, 1, 1], [], []>} : vector<8x128xf32>, vector<128x128xf32>, vector<8x128xf32> -> vector<8x128xf32>
    %c424 = arith.constant 424 : index
    %c0_15 = arith.constant 0 : index
    %25 = vector.load %arg2[%c424, %c0_15] : memref<432x128xf32, #tpu.memory_space<vmem>>, vector<1x128xf32>
    %26 = vector.broadcast %25 : vector<1x128xf32> to vector<8x128xf32>
    %27 = arith.addf %24, %26 : vector<8x128xf32>
    %c0_16 = arith.constant 0 : index
    %c0_17 = arith.constant 0 : index
    %28 = vector.load %arg3[%c0_16, %c0_17] : memref<8x128xf32, #tpu.memory_space<vmem>>, vector<8x128xf32>
    tpu.vector_store %arg3[%c0_16, %c0_17], %27 {strides = array<i32>} : memref<8x128xf32, #tpu.memory_space<vmem>>, vector<8x128xf32>,
    return
  }
  func.func @transform_0(%arg0: i32) -> (i32, i32) {
    %c0_i32 = arith.constant 0 : i32
    %c0_i32_0 = arith.constant 0 : i32
    return %arg0, %c0_i32 : i32, i32
  }
  func.func @transform_1(%arg0: i32) -> (i32, i32) {
    %c0_i32 = arith.constant 0 : i32
    %c0_i32_0 = arith.constant 0 : i32
    %c0_i32_1 = arith.constant 0 : i32
    return %c0_i32, %c0_i32_0 : i32, i32
  }
  func.func @transform_2(%arg0: i32) -> (i32, i32) {
    %c0_i32 = arith.constant 0 : i32
    %c0_i32_0 = arith.constant 0 : i32
    return %arg0, %c0_i32 : i32, i32
  }
}

</mosaic_0001>

<llo_original>
// kernel: mlp_forward.1
$region0: #{mlp_forward.1}
  #allocation0 [shape = 'u32[]', space=smem, size = 0x4, offset = 0x4, fixed_abs, tag = 'smem constant byte address 0x4 - core index']
  #allocation1 [shape = 'u32[144,128]{1,0:T(1,128)}', space=vmem, size = 0x12000, scoped, tag = 'internal scratch']
  %s0 = inlined_call_operand.vmem [shape: bf16[8,16], index: 0, kind: input, shape index: {}]
  %s1 = inlined_call_operand.vmem [shape: f32[432,128], index: 1, kind: input, shape index: {}]
  %s2 = inlined_call_operand.vmem [shape: f32[8,128], index: 2, kind: output, shape index: {}]
  %s3 = sld [smem:[#allocation0]]
  $region18: #{mlp_forward.1} parent=0
    _
  %s5 = ssub.s32 1, %s3
  %s6 = scalar_select 0, %s5, %s3
  // Predicated region
  $region2: #{mlp_forward.1} parent=0 // pred_check
    _
  $region3: #{mlp_forward.1} parent=0 // pred_check_branch
    %8 = sbr.rel (0) target = $region5
  $region4: #{mlp_forward.1} parent=0 // pred_region
    _
  $region5: #{mlp_forward.1} parent=0 // pred_fallthru
    _
  // Predicated region
  $region6: #{mlp_forward.1} parent=0 // pred_check
    _
  $region7: #{mlp_forward.1} parent=0 // pred_check_branch
    %10 = sbr.rel (0) target = $region9
  $region8: #{mlp_forward.1} parent=0 // pred_region
    _
  $region9: #{mlp_forward.1} parent=0 // pred_fallthru
    _
  %v11 = vld [vmem:[%s0] sm:$0xf]
  %v12 = vunpack.c.l.bf16 %v11
  %v13 = vld [vmem:[%s1] sm:$0xff]
  %v14 = vld [vmem:[%s1 + $0x8] sm:$0xff]
  %v15 = vld [vmem:[%s1 + $0x10] sm:$0x1]
  %v16 = vlaneseq
  %v17 = vshrl.u32 %v16, 7
  %v18 = vsub.s32 0, %v17
  %v19 = vrot.slane %v15, %v18
  %vm20 = vcmask 130048
  %v22 = vsel %vm20, %v12, 0
  %24 = vmatprep.subr.mxu0 0.0
  %25 = vmatpush1.msra.mxu0 0.0
  %26 = vmatprep.subr.mxu0 0.0
  %27 = vmatpush1.msra.mxu0 0.0
  %28 = vmatprep.subr.mxu0 0.0
  %29 = vmatpush1.msra.mxu0 0.0
  %30 = vmatprep.subr.mxu0 0.0
  %31 = vmatpush1.msra.mxu0 0.0
  %32 = vmatprep.subr.mxu0 0.0
  %33 = vmatpush1.msra.mxu0 0.0
  %34 = vmatprep.subr.mxu0 0.0
  %35 = vmatpush1.msra.mxu0 0.0
  %36 = vmatprep.subr.mxu0 0.0
  %37 = vmatpush1.msra.mxu0 0.0
  %38 = vmatprep.subr.mxu0 0.0
  %39 = vmatpush1.msra.mxu0 0.0
  %40 = vmatprep.subr.mxu0 0.0
  %41 = vmatpush1.msra.mxu0 0.0
  %42 = vmatprep.subr.mxu0 0.0
  %43 = vmatpush1.msra.mxu0 0.0
  %44 = vmatprep.subr.mxu0 0.0
  %45 = vmatpush1.msra.mxu0 0.0
  %46 = vmatprep.subr.mxu0 0.0
  %47 = vmatpush1.msra.mxu0 0.0
  %48 = vmatprep.subr.mxu0 0.0
  %49 = vmatpush1.msra.mxu0 0.0
  %50 = vmatprep.subr.mxu0 0.0
  %51 = vmatpush1.msra.mxu0 0.0
  %52 = vmatprep.subr.mxu0 0.0
  %53 = vmatpush1.msra.mxu0 %v14
  %54 = vmatprep.subr.mxu0 0.0
  %55 = vmatpush1.msra.mxu0 %v13
  %56 = vmatprep.subr.mxu0 0.0
  %57 = vmatpush2.msra.mxu0 0.0
  %58 = vmatprep.subr.mxu0 0.0
  %59 = vmatpush2.msra.mxu0 0.0
  %60 = vmatprep.subr.mxu0 0.0
  %61 = vmatpush2.msra.mxu0 0.0
  %62 = vmatprep.subr.mxu0 0.0
  %63 = vmatpush2.msra.mxu0 0.0
  %64 = vmatprep.subr.mxu0 0.0
  %65 = vmatpush2.msra.mxu0 0.0
  %66 = vmatprep.subr.mxu0 0.0
  %67 = vmatpush2.msra.mxu0 0.0
  %68 = vmatprep.subr.mxu0 0.0
  %69 = vmatpush2.msra.mxu0 0.0
  %70 = vmatprep.subr.mxu0 0.0
  %71 = vmatpush2.msra.mxu0 0.0
  %72 = vmatprep.subr.mxu0 0.0
  %73 = vmatpush2.msra.mxu0 0.0
  %74 = vmatprep.subr.mxu0 0.0
  %75 = vmatpush2.msra.mxu0 0.0
  %76 = vmatprep.subr.mxu0 0.0
  %77 = vmatpush2.msra.mxu0 0.0
  %78 = vmatprep.subr.mxu0 0.0
  %79 = vmatpush2.msra.mxu0 0.0
  %80 = vmatprep.subr.mxu0 0.0
  %81 = vmatpush2.msra.mxu0 0.0
  %82 = vmatprep.subr.mxu0 0.0
  %83 = vmatpush2.msra.mxu0 0.0
  %84 = vmatprep.subr.mxu0 0.0
  %85 = vmatpush2.msra.mxu0 0.0
  %86 = vmatprep.subr.mxu0 0.0
  %87 = vmatpush2.msra.mxu0 0.0
  %88 = vmatprep.mubr.f32.mxu0 0.0
  %89 = vmatmul.mubr.f32.gmra.mxu0 %v22
  %v90 = vpop.f32.mrf.mxu0
  %v91 = vadd.f32 %v19, %v90
  %v92 = vpop.f32.mrf.mxu0
  %93 = vdwg.mxu0
  %v94 = vmax.f32 %v91, 0.0
  %v95 = vld [vmem:[%s1 + $0x18] sm:$0xff]
  %v96 = vld [vmem:[%s1 + $0x20] sm:$0xff]
  %v97 = vld [vmem:[%s1 + $0x28] sm:$0xff]
  %v98 = vld [vmem:[%s1 + $0x30] sm:$0xff]
  %v99 = vld [vmem:[%s1 + $0x38] sm:$0xff]
  %v100 = vld [vmem:[%s1 + $0x40] sm:$0xff]
  %v101 = vld [vmem:[%s1 + $0x48] sm:$0xff]
  %v102 = vld [vmem:[%s1 + $0x50] sm:$0xff]
  %v103 = vld [vmem:[%s1 + $0x58] sm:$0xff]
  %v104 = vld [vmem:[%s1 + $0x60] sm:$0xff]
  %v105 = vld [vmem:[%s1 + $0x68] sm:$0xff]
  %v106 = vld [vmem:[%s1 + $0x70] sm:$0xff]
  %v107 = vld [vmem:[%s1 + $0x78] sm:$0xff]
  %v108 = vld [vmem:[%s1 + $0x80] sm:$0xff]
  %v109 = vld [vmem:[%s1 + $0x88] sm:$0xff]
  %v110 = vld [vmem:[%s1 + $0x90] sm:$0xff]
  %v111 = vld [vmem:[%s1 + $0x98] sm:$0x1]
  %v112 = vlaneseq
  %v113 = vshrl.u32 %v112, 7
  %v114 = vsub.s32 0, %v113
  %v115 = vrot.slane %v111, %v114
  %116 = vmatprep.subr.mxu0 0.0
  %117 = vmatpush1.msra.mxu0 %v110
  %118 = vmatprep.subr.mxu0 0.0
  %119 = vmatpush1.msra.mxu0 %v109
  %120 = vmatprep.subr.mxu0 0.0
  %121 = vmatpush1.msra.mxu0 %v108
  %122 = vmatprep.subr.mxu0 0.0
  %123 = vmatpush1.msra.mxu0 %v107
  %124 = vmatprep.subr.mxu0 0.0
  %125 = vmatpush1.msra.mxu0 %v106
  %126 = vmatprep.subr.mxu0 0.0
  %127 = vmatpush1.msra.mxu0 %v105
  %128 = vmatprep.subr.mxu0 0.0
  %129 = vmatpush1.msra.mxu0 %v104
  %130 = vmatprep.subr.mxu0 0.0
  %131 = vmatpush1.msra.mxu0 %v103
  %132 = vmatprep.subr.mxu0 0.0
  %133 = vmatpush1.msra.mxu0 %v102
  %134 = vmatprep.subr.mxu0 0.0
  %135 = vmatpush1.msra.mxu0 %v101
  %136 = vmatprep.subr.mxu0 0.0
  %137 = vmatpush1.msra.mxu0 %v100
  %138 = vmatprep.subr.mxu0 0.0
  %139 = vmatpush1.msra.mxu0 %v99
  %140 = vmatprep.subr.mxu0 0.0
  %141 = vmatpush1.msra.mxu0 %v98
  %142 = vmatprep.subr.mxu0 0.0
  %143 = vmatpush1.msra.mxu0 %v97
  %144 = vmatprep.subr.mxu0 0.0
  %145 = vmatpush1.msra.mxu0 %v96
  %146 = vmatprep.subr.mxu0 0.0
  %147 = vmatpush1.msra.mxu0 %v95
  %148 = vmatprep.subr.mxu0 0.0
  %149 = vmatpush2.msra.mxu0 0.0
  %150 = vmatprep.subr.mxu0 0.0
  %151 = vmatpush2.msra.mxu0 0.0
  %152 = vmatprep.subr.mxu0 0.0
  %153 = vmatpush2.msra.mxu0 0.0
  %154 = vmatprep.subr.mxu0 0.0
  %155 = vmatpush2.msra.mxu0 0.0
  %156 = vmatprep.subr.mxu0 0.0
  %157 = vmatpush2.msra.mxu0 0.0
  %158 = vmatprep.subr.mxu0 0.0
  %159 = vmatpush2.msra.mxu0 0.0
  %160 = vmatprep.subr.mxu0 0.0
  %161 = vmatpush2.msra.mxu0 0.0
  %162 = vmatprep.subr.mxu0 0.0
  %163 = vmatpush2.msra.mxu0 0.0
  %164 = vmatprep.subr.mxu0 0.0
  %165 = vmatpush2.msra.mxu0 0.0
  %166 = vmatprep.subr.mxu0 0.0
  %167 = vmatpush2.msra.mxu0 0.0
  %168 = vmatprep.subr.mxu0 0.0
  %169 = vmatpush2.msra.mxu0 0.0
  %170 = vmatprep.subr.mxu0 0.0
  %171 = vmatpush2.msra.mxu0 0.0
  %172 = vmatprep.subr.mxu0 0.0
  %173 = vmatpush2.msra.mxu0 0.0
  %174 = vmatprep.subr.mxu0 0.0
  %175 = vmatpush2.msra.mxu0 0.0
  %176 = vmatprep.subr.mxu0 0.0
  %177 = vmatpush2.msra.mxu0 0.0
  %178 = vmatprep.subr.mxu0 0.0
  %179 = vmatpush2.msra.mxu0 0.0
  %180 = vmatprep.mubr.f32.mxu0 0.0
  %181 = vmatmul.mubr.f32.gmra.mxu0 %v94
  %v182 = vpop.f32.mrf.mxu0
  %v183 = vadd.f32 %v115, %v182
  %v184 = vpop.f32.mrf.mxu0
  %185 = vdwg.mxu0
  %v186 = vmax.f32 %v183, 0.0
  %v187 = vld [vmem:[%s1 + $0xa0] sm:$0xff]
  %v188 = vld [vmem:[%s1 + $0xa8] sm:$0xff]
  %v189 = vld [vmem:[%s1 + $0xb0] sm:$0xff]
  %v190 = vld [vmem:[%s1 + $0xb8] sm:$0xff]
  %v191 = vld [vmem:[%s1 + $0xc0] sm:$0xff]
  %v192 = vld [vmem:[%s1 + $0xc8] sm:$0xff]
  %v193 = vld [vmem:[%s1 + $0xd0] sm:$0xff]
  %v194 = vld [vmem:[%s1 + $0xd8] sm:$0xff]
  %v195 = vld [vmem:[%s1 + $0xe0] sm:$0xff]
  %v196 = vld [vmem:[%s1 + $0xe8] sm:$0xff]
  %v197 = vld [vmem:[%s1 + $0xf0] sm:$0xff]
  %v198 = vld [vmem:[%s1 + $0xf8] sm:$0xff]
  %v199 = vld [vmem:[%s1 + $0x100] sm:$0xff]
  %v200 = vld [vmem:[%s1 + $0x108] sm:$0xff]
  %v201 = vld [vmem:[%s1 + $0x110] sm:$0xff]
  %v202 = vld [vmem:[%s1 + $0x118] sm:$0xff]
  %v203 = vld [vmem:[%s1 + $0x120] sm:$0x1]
  %v204 = vlaneseq
  %v205 = vshrl.u32 %v204, 7
  %v206 = vsub.s32 0, %v205
  %v207 = vrot.slane %v203, %v206
  %208 = vmatprep.subr.mxu0 0.0
  %209 = vmatpush1.msra.mxu0 %v202
  %210 = vmatprep.subr.mxu0 0.0
  %211 = vmatpush1.msra.mxu0 %v201
  %212 = vmatprep.subr.mxu0 0.0
  %213 = vmatpush1.msra.mxu0 %v200
  %214 = vmatprep.subr.mxu0 0.0
  %215 = vmatpush1.msra.mxu0 %v199
  %216 = vmatprep.subr.mxu0 0.0
  %217 = vmatpush1.msra.mxu0 %v198
  %218 = vmatprep.subr.mxu0 0.0
  %219 = vmatpush1.msra.mxu0 %v197
  %220 = vmatprep.subr.mxu0 0.0
  %221 = vmatpush1.msra.mxu0 %v196
  %222 = vmatprep.subr.mxu0 0.0
  %223 = vmatpush1.msra.mxu0 %v195
  %224 = vmatprep.subr.mxu0 0.0
  %225 = vmatpush1.msra.mxu0 %v194
  %226 = vmatprep.subr.mxu0 0.0
  %227 = vmatpush1.msra.mxu0 %v193
  %228 = vmatprep.subr.mxu0 0.0
  %229 = vmatpush1.msra.mxu0 %v192
  %230 = vmatprep.subr.mxu0 0.0
  %231 = vmatpush1.msra.mxu0 %v191
  %232 = vmatprep.subr.mxu0 0.0
  %233 = vmatpush1.msra.mxu0 %v190
  %234 = vmatprep.subr.mxu0 0.0
  %235 = vmatpush1.msra.mxu0 %v189
  %236 = vmatprep.subr.mxu0 0.0
  %237 = vmatpush1.msra.mxu0 %v188
  %238 = vmatprep.subr.mxu0 0.0
  %239 = vmatpush1.msra.mxu0 %v187
  %240 = vmatprep.subr.mxu0 0.0
  %241 = vmatpush2.msra.mxu0 0.0
  %242 = vmatprep.subr.mxu0 0.0
  %243 = vmatpush2.msra.mxu0 0.0
  %244 = vmatprep.subr.mxu0 0.0
  %245 = vmatpush2.msra.mxu0 0.0
  %246 = vmatprep.subr.mxu0 0.0
  %247 = vmatpush2.msra.mxu0 0.0
  %248 = vmatprep.subr.mxu0 0.0
  %249 = vmatpush2.msra.mxu0 0.0
  %250 = vmatprep.subr.mxu0 0.0
  %251 = vmatpush2.msra.mxu0 0.0
  %252 = vmatprep.subr.mxu0 0.0
  %253 = vmatpush2.msra.mxu0 0.0
  %254 = vmatprep.subr.mxu0 0.0
  %255 = vmatpush2.msra.mxu0 0.0
  %256 = vmatprep.subr.mxu0 0.0
  %257 = vmatpush2.msra.mxu0 0.0
  %258 = vmatprep.subr.mxu0 0.0
  %259 = vmatpush2.msra.mxu0 0.0
  %260 = vmatprep.subr.mxu0 0.0
  %261 = vmatpush2.msra.mxu0 0.0
  %262 = vmatprep.subr.mxu0 0.0
  %263 = vmatpush2.msra.mxu0 0.0
  %264 = vmatprep.subr.mxu0 0.0
  %265 = vmatpush2.msra.mxu0 0.0
  %266 = vmatprep.subr.mxu0 0.0
  %267 = vmatpush2.msra.mxu0 0.0
  %268 = vmatprep.subr.mxu0 0.0
  %269 = vmatpush2.msra.mxu0 0.0
  %270 = vmatprep.subr.mxu0 0.0
  %271 = vmatpush2.msra.mxu0 0.0
  %272 = vmatprep.mubr.f32.mxu0 0.0
  %273 = vmatmul.mubr.f32.gmra.mxu0 %v186
  %v274 = vpop.f32.mrf.mxu0
  %v275 = vadd.f32 %v207, %v274
  %v276 = vpop.f32.mrf.mxu0
  %277 = vdwg.mxu0
  %v278 = vmax.f32 %v275, 0.0
  %v279 = vld [vmem:[%s1 + $0x128] sm:$0xff]
  %v280 = vld [vmem:[%s1 + $0x130] sm:$0xff]
  %v281 = vld [vmem:[%s1 + $0x138] sm:$0xff]
  %v282 = vld [vmem:[%s1 + $0x140] sm:$0xff]
  %v283 = vld [vmem:[%s1 + $0x148] sm:$0xff]
  %v284 = vld [vmem:[%s1 + $0x150] sm:$0xff]
  %v285 = vld [vmem:[%s1 + $0x158] sm:$0xff]
  %v286 = vld [vmem:[%s1 + $0x160] sm:$0xff]
  %v287 = vld [vmem:[%s1 + $0x168] sm:$0xff]
  %v288 = vld [vmem:[%s1 + $0x170] sm:$0xff]
  %v289 = vld [vmem:[%s1 + $0x178] sm:$0xff]
  %v290 = vld [vmem:[%s1 + $0x180] sm:$0xff]
  %v291 = vld [vmem:[%s1 + $0x188] sm:$0xff]
  %v292 = vld [vmem:[%s1 + $0x190] sm:$0xff]
  %v293 = vld [vmem:[%s1 + $0x198] sm:$0xff]
  %v294 = vld [vmem:[%s1 + $0x1a0] sm:$0xff]
  %v295 = vld [vmem:[%s1 + $0x1a8] sm:$0x1]
  %v296 = vlaneseq
  %v297 = vshrl.u32 %v296, 7
  %v298 = vsub.s32 0, %v297
  %v299 = vrot.slane %v295, %v298
  %300 = vmatprep.subr.mxu0 0.0
  %301 = vmatpush1.msra.mxu0 %v294
  %302 = vmatprep.subr.mxu0 0.0
  %303 = vmatpush1.msra.mxu0 %v293
  %304 = vmatprep.subr.mxu0 0.0
  %305 = vmatpush1.msra.mxu0 %v292
  %306 = vmatprep.subr.mxu0 0.0
  %307 = vmatpush1.msra.mxu0 %v291
  %308 = vmatprep.subr.mxu0 0.0
  %309 = vmatpush1.msra.mxu0 %v290
  %310 = vmatprep.subr.mxu0 0.0
  %311 = vmatpush1.msra.mxu0 %v289
  %312 = vmatprep.subr.mxu0 0.0
  %313 = vmatpush1.msra.mxu0 %v288
  %314 = vmatprep.subr.mxu0 0.0
  %315 = vmatpush1.msra.mxu0 %v287
  %316 = vmatprep.subr.mxu0 0.0
  %317 = vmatpush1.msra.mxu0 %v286
  %318 = vmatprep.subr.mxu0 0.0
  %319 = vmatpush1.msra.mxu0 %v285
  %320 = vmatprep.subr.mxu0 0.0
  %321 = vmatpush1.msra.mxu0 %v284
  %322 = vmatprep.subr.mxu0 0.0
  %323 = vmatpush1.msra.mxu0 %v283
  %324 = vmatprep.subr.mxu0 0.0
  %325 = vmatpush1.msra.mxu0 %v282
  %326 = vmatprep.subr.mxu0 0.0
  %327 = vmatpush1.msra.mxu0 %v281
  %328 = vmatprep.subr.mxu0 0.0
  %329 = vmatpush1.msra.mxu0 %v280
  %330 = vmatprep.subr.mxu0 0.0
  %331 = vmatpush1.msra.mxu0 %v279
  %332 = vmatprep.subr.mxu0 0.0
  %333 = vmatpush2.msra.mxu0 0.0
  %334 = vmatprep.subr.mxu0 0.0
  %335 = vmatpush2.msra.mxu0 0.0
  %336 = vmatprep.subr.mxu0 0.0
  %337 = vmatpush2.msra.mxu0 0.0
  %338 = vmatprep.subr.mxu0 0.0
  %339 = vmatpush2.msra.mxu0 0.0
  %340 = vmatprep.subr.mxu0 0.0
  %341 = vmatpush2.msra.mxu0 0.0
  %342 = vmatprep.subr.mxu0 0.0
  %343 = vmatpush2.msra.mxu0 0.0
  %344 = vmatprep.subr.mxu0 0.0
  %345 = vmatpush2.msra.mxu0 0.0
  %346 = vmatprep.subr.mxu0 0.0
  %347 = vmatpush2.msra.mxu0 0.0
  %348 = vmatprep.subr.mxu0 0.0
  %349 = vmatpush2.msra.mxu0 0.0
  %350 = vmatprep.subr.mxu0 0.0
  %351 = vmatpush2.msra.mxu0 0.0
  %352 = vmatprep.subr.mxu0 0.0
  %353 = vmatpush2.msra.mxu0 0.0
  %354 = vmatprep.subr.mxu0 0.0
  %355 = vmatpush2.msra.mxu0 0.0
  %356 = vmatprep.subr.mxu0 0.0
  %357 = vmatpush2.msra.mxu0 0.0
  %358 = vmatprep.subr.mxu0 0.0
  %359 = vmatpush2.msra.mxu0 0.0
  %360 = vmatprep.subr.mxu0 0.0
  %361 = vmatpush2.msra.mxu0 0.0
  %362 = vmatprep.subr.mxu0 0.0
  %363 = vmatpush2.msra.mxu0 0.0
  %364 = vmatprep.mubr.f32.mxu0 0.0
  %365 = vmatmul.mubr.f32.gmra.mxu0 %v278
  %v366 = vpop.f32.mrf.mxu0
  %v367 = vadd.f32 %v299, %v366
  %v368 = vpop.f32.mrf.mxu0
  %369 = vdwg.mxu0
  %370 = vst [vmem:[%s2] sm:$0xff] %v367
  // Predicated region
  $region10: #{mlp_forward.1} parent=0 // pred_check
    _
  $region11: #{mlp_forward.1} parent=0 // pred_check_branch
    %372 = sbr.rel (0) target = $region13
  $region12: #{mlp_forward.1} parent=0 // pred_region
    _
  $region13: #{mlp_forward.1} parent=0 // pred_fallthru
    _
  // Predicated region
  $region14: #{mlp_forward.1} parent=0 // pred_check
    _
  $region15: #{mlp_forward.1} parent=0 // pred_check_branch
    %374 = sbr.rel (0) target = $region17
  $region16: #{mlp_forward.1} parent=0 // pred_region
    _
  $region17: #{mlp_forward.1} parent=0 // pred_fallthru
    _

</llo_original>
